<compile_context>
chip_gen: v7x
topology: tpu7x:2x2x1
jax: 0.10.0
libtpu: 0.0.40
codegen_flags: <defaults>
</compile_context>

<pallas_src>
import jax
import jax.numpy as jnp
from jax.experimental import pallas as pl
from jax.experimental.pallas import tpu as pltpu


def _swish_kernel(x_ref, o_ref):
    x = x_ref[...]
    # sigmoid(x) = 1 / (1 + exp(-x)); computed in the input dtype.
    sig = 1.0 / (1.0 + jnp.exp(-x))
    o_ref[...] = (x * sig).astype(o_ref.dtype)


def swish(x: jax.Array, *, block_bytes: int = 2 * 1024 * 1024) -> jax.Array:
    """Swish / SiLU: x * sigmoid(x), elementwise, any shape."""
    orig_shape = x.shape
    dtype = x.dtype
    n = x.size
    if n == 0:
        return x  # zero-sized input: nothing to do

    itemsize = jnp.dtype(dtype).itemsize
    flat = x.reshape(-1)

    # --- choose a lane-dense 2D slab (rows, cols) ---------------------------
    cols = None
    for cand in (2048, 1024, 512, 256, 128):
        if n % cand == 0:
            cols = cand
            break
    if cols is not None:
        x2 = flat.reshape(-1, cols)
    else:
        # Fallback: original trailing dim as lane axis. A full-extent last dim
        # in a BlockSpec is always legal even if <128 / not a multiple of 128.
        last = orig_shape[-1] if x.ndim >= 1 else 1
        x2 = flat.reshape(-1, last)

    rows, cols = x2.shape

    # --- block row count from a byte budget ---------------------------------
    row_bytes = cols * itemsize
    tr = max(1, block_bytes // row_bytes)
    if tr >= rows:
        tr = rows  # full row extent (always legal)
    else:
        # Partial trailing block allowed; tiled row dim must be a multiple of 8.
        tr = min(rows, max(8, (tr // 8) * 8))

    grid = (pl.cdiv(rows, tr),)
    nbytes = n * itemsize

    out2 = pl.pallas_call(
        _swish_kernel,
        out_shape=jax.ShapeDtypeStruct((rows, cols), dtype),
        grid_spec=pltpu.PrefetchScalarGridSpec(
            num_scalar_prefetch=0,
            grid=grid,
            in_specs=[pl.BlockSpec((tr, cols), lambda i: (i, 0))],
            out_specs=pl.BlockSpec((tr, cols), lambda i: (i, 0)),
        ),
        compiler_params=pltpu.CompilerParams(
            dimension_semantics=("parallel",),
            vmem_limit_bytes=32 * 1024 * 1024,
        ),
        cost_estimate=pl.CostEstimate(
            flops=4 * n,            # neg, add, div, mul per element (approx)
            transcendentals=n,      # one exp per element
            bytes_accessed=2 * nbytes,
        ),
    )(x2)

    return out2.reshape(orig_shape)


if __name__ == "__main__":
    key = jax.random.PRNGKey(0)

    # GPT-3-ish activation tensor (batch=2, seq=8, hidden=32): element count
    # is a multiple of 128 -> lane-dense path.
    x = jax.random.normal(key, (2, 8, 32), dtype=jnp.float32)
    out = jax.block_until_ready(swish(x))
    ref = x * jax.nn.sigmoid(x)
    assert out.shape == x.shape and out.dtype == x.dtype
    assert jnp.allclose(out, ref, atol=1e-5, rtol=1e-5)

    # Awkward shape (105 elements, not a multiple of 128) -> fallback path.
    y = jax.random.normal(jax.random.PRNGKey(1), (3, 7, 5), dtype=jnp.float32)
    out_y = jax.block_until_ready(swish(y))
    ref_y = y * jax.nn.sigmoid(y)
    assert out_y.shape == y.shape and out_y.dtype == y.dtype
    assert jnp.allclose(out_y, ref_y, atol=1e-5, rtol=1e-5)

    print("KERNEL_OK")
</pallas_src>

<mosaic_0001>
module attributes {stable_mosaic.version = 11 : i64} {
  func.func @_swish_kernel(%arg0: i32, %arg1: memref<1x512xf32, #tpu.memory_space<vmem>>, %arg2: memref<1x512xf32, #tpu.memory_space<vmem>>) attributes {dimension_semantics = [#tpu.dimension_semantics<parallel>], iteration_bounds = array<i64: 1>, scalar_prefetch = 0 : i64, scratch_operands = 0 : i64, tpu.core_type = #tpu.core_type<tc>, window_params = [{transform_indices = @transform_0, window_bounds = array<i64: 1, 512>}, {transform_indices = @transform_1, window_bounds = array<i64: 1, 512>}]} {
    %c0 = arith.constant 0 : index
    %c0_0 = arith.constant 0 : index
    %0 = vector.load %arg1[%c0, %c0_0] : memref<1x512xf32, #tpu.memory_space<vmem>>, vector<1x512xf32>
    %cst = arith.constant 0.000000e+00 : f32
    %1 = vector.broadcast %cst : f32 to vector<1x512xf32>
    %2 = arith.subf %1, %0 : vector<1x512xf32>
    %3 = math.exp %2 : vector<1x512xf32>
    %cst_1 = arith.constant 1.000000e+00 : f32
    %4 = vector.broadcast %cst_1 : f32 to vector<1x512xf32>
    %5 = arith.addf %4, %3 : vector<1x512xf32>
    %cst_2 = arith.constant 1.000000e+00 : f32
    %6 = vector.broadcast %cst_2 : f32 to vector<1x512xf32>
    %7 = arith.divf %6, %5 : vector<1x512xf32>
    %8 = arith.mulf %0, %7 : vector<1x512xf32>
    %c0_3 = arith.constant 0 : index
    %c0_4 = arith.constant 0 : index
    %9 = vector.load %arg2[%c0_3, %c0_4] : memref<1x512xf32, #tpu.memory_space<vmem>>, vector<1x512xf32>
    tpu.vector_store %arg2[%c0_3, %c0_4], %8 {strides = array<i32>} : memref<1x512xf32, #tpu.memory_space<vmem>>, vector<1x512xf32>,
    return
  }
  func.func @transform_0(%arg0: i32) -> (i32, i32) {
    %c0_i32 = arith.constant 0 : i32
    %c0_i32_0 = arith.constant 0 : i32
    return %arg0, %c0_i32 : i32, i32
  }
  func.func @transform_1(%arg0: i32) -> (i32, i32) {
    %c0_i32 = arith.constant 0 : i32
    %c0_i32_0 = arith.constant 0 : i32
    return %arg0, %c0_i32 : i32, i32
  }
}

</mosaic_0001>

<llo_original>
// kernel: tpu_custom_call.1
$region0: #{tpu_custom_call.1}
  #allocation0 [shape = 'u32[]', space=smem, size = 0x4, offset = 0x4, fixed_abs, tag = 'smem constant byte address 0x4 - core index']
  #allocation1 [shape = 'u32[144,128]{1,0:T(1,128)}', space=vmem, size = 0x12000, scoped, tag = 'internal scratch']
  %s0 = inlined_call_operand.hbm [shape: f32[1,512], index: 0, kind: input, shape index: {}]
  %s1 = inlined_call_operand.hbm [shape: f32[1,512], index: 1, kind: output, shape index: {}]
  %s2 = sld [smem:[#allocation0]]
  $region18: #{tpu_custom_call.1} parent=0
    _
  %s4 = ssub.s32 1, %s2
  %s5 = scalar_select 0, %s4, %s2
  $region1: #{tpu_custom_call.1} parent=0
    #allocation2 [shape = 'u8[2048]{0}', space=vmem, size = 0x800, scoped, tag = 'input window, operand 0, single buffered']
    #allocation3 [shape = 's32[1]{0}', space=sflag, size = 0x4, scoped, tag = 'scoped memory for tpu_custom_call.1']
    #allocation4 [shape = 's32[1]{0}', space=sflag, size = 0x4, scoped, tag = 'scoped memory for tpu_custom_call.1']
    #allocation5 [shape = 'u8[2048]{0}', space=vmem, size = 0x800, scoped, tag = 'output window, operand 0, single buffered']
    %6 = vsyncpa [#allocation3], 0
    %7 = vsyncpa [#allocation4], 0
    // Predicated region
    $region2: #{tpu_custom_call.1} parent=1 // pred_check
      _
    $region3: #{tpu_custom_call.1} parent=1 // pred_check_branch
      %9 = sbr.rel (0) target = $region5
    $region4: #{tpu_custom_call.1} parent=1 // pred_region
      %s11 = ssub.s32 64, 64
      %12 = vsyncadd [#allocation3], %s11
      %s14 = sshll.u32 [#allocation2], 4
      %s15 = int_to_ptr.vmem [resolvable:$true] %s14
      %17 = dma.hbm_to_vmem [thread:$0]  %s0, 64, %s15, [#allocation3]
    $region5: #{tpu_custom_call.1} parent=1 // pred_fallthru
      _
    // Predicated region
    $region6: #{tpu_custom_call.1} parent=1 // pred_check
      _
    $region7: #{tpu_custom_call.1} parent=1 // pred_check_branch
      %19 = sbr.rel (0) target = $region9
    $region8: #{tpu_custom_call.1} parent=1 // pred_region
      %20 = dma.done [#allocation3], 64
    $region9: #{tpu_custom_call.1} parent=1 // pred_fallthru
      _
    %v21 = vld [vmem:[#allocation2] sm:$0xf]
    %v22 = vsub.f32 0.0, %v21
    %v23 = vmul.f32 %v22, 1.442695
    %v24 = vpow.pop %v23
    %v25 = vadd.f32 %v24, 1.0
    %v26 = vrcp.pop %v25
    %v27 = vmul.f32 1.0, %v26
    %v28 = vmul.f32 %v21, %v27
    %v29 = vlaneseq
    %vm30 = vcmp.ge.s32.totalorder %v29, 0
    %vm31 = vcmp.lt.s32.totalorder %v29, 512
    %vm32 = vmand %vm30, %vm31
    %33 = vst.msk [vmem:[#allocation5] sm:$0xf] %vm32, %v28
    // Predicated region
    $region10: #{tpu_custom_call.1} parent=1 // pred_check
      _
    $region11: #{tpu_custom_call.1} parent=1 // pred_check_branch
      %35 = sbr.rel (0) target = $region13
    $region12: #{tpu_custom_call.1} parent=1 // pred_region
      %s37 = ssub.s32 64, 64
      %38 = vsyncadd [#allocation4], %s37
      %s40 = sshll.u32 [#allocation5], 4
      %s41 = int_to_ptr.vmem [resolvable:$true] %s40
      %43 = dma.vmem_to_hbm [thread:$0]  %s41, 64, %s1, [#allocation4]
    $region13: #{tpu_custom_call.1} parent=1 // pred_fallthru
      _
    // Predicated region
    $region14: #{tpu_custom_call.1} parent=1 // pred_check
      _
    $region15: #{tpu_custom_call.1} parent=1 // pred_check_branch
      %45 = sbr.rel (0) target = $region17
    $region16: #{tpu_custom_call.1} parent=1 // pred_region
      %46 = dma.done [#allocation4], 64
    $region17: #{tpu_custom_call.1} parent=1 // pred_fallthru
      _
    %47 = vsyncpa [#allocation3], 1
    %48 = vsyncpa [#allocation4], 1

</llo_original>
